<compile_context>
chip_gen: v7x
topology: tpu7x:2x2x1
jax: 0.10.0
libtpu: 0.0.40
codegen_flags: <defaults>
</compile_context>

<pallas_src>
import functools

import jax
import jax.numpy as jnp
from jax.experimental import pallas as pl
from jax.experimental.pallas import tpu as pltpu

_LANES = 128
_MAX_BCE_BLOCK_ROWS = 1024          # 1024 x 128 x 4B = 512 KiB per f32 input tile
_MAX_MC_BLOCK_ROWS = 512
_MAX_MC_TILE_BYTES = 2 * 1024 * 1024  # cap on a single logits tile (v7x-safe)


# ---------------------------------------------------------------------------
# Kernels
# ---------------------------------------------------------------------------

def _bce_kernel(x_ref, y_ref, sum_ref, *, total, block_rows):
    """BCE-with-logits partial sums over a lane-dense (block_rows, 128) tile."""
    x = x_ref[...].astype(jnp.float32)
    y = y_ref[...].astype(jnp.float32)
    # PyTorch-stable formulation: max(x,0) - x*y + log1p(exp(-|x|))
    per = jnp.maximum(x, 0.0) - x * y + jnp.log1p(jnp.exp(-jnp.abs(x)))
    rows = jax.lax.broadcasted_iota(jnp.int32, x.shape, 0)
    lanes = jax.lax.broadcasted_iota(jnp.int32, x.shape, 1)
    gidx = (pl.program_id(0) * block_rows + rows) * _LANES + lanes
    per = jnp.where(gidx < total, per, 0.0)            # mask padded / OOB tail
    # Reduce to one (8,128) vreg of per-(sublane,lane) partial sums (pure VPU adds).
    sum_ref[...] = jnp.sum(per.reshape(block_rows // 8, 8, _LANES), axis=0)


def _masked_bce_kernel(x_ref, y_ref, sum_ref, cnt_ref, *, total, block_rows):
    """Masked BCE-with-logits: NaN targets are unlabeled (multi-label path)."""
    x = x_ref[...].astype(jnp.float32)
    y = y_ref[...].astype(jnp.float32)
    rows = jax.lax.broadcasted_iota(jnp.int32, x.shape, 0)
    lanes = jax.lax.broadcasted_iota(jnp.int32, x.shape, 1)
    gidx = (pl.program_id(0) * block_rows + rows) * _LANES + lanes
    labeled = (y == y) & (gidx < total)                 # NaN != NaN -> unlabeled
    per = jnp.maximum(x, 0.0) - x * y + jnp.log1p(jnp.exp(-jnp.abs(x)))
    per = jnp.where(labeled, per, 0.0)
    cnt = labeled.astype(jnp.float32)
    sum_ref[...] = jnp.sum(per.reshape(block_rows // 8, 8, _LANES), axis=0)
    cnt_ref[...] = jnp.sum(cnt.reshape(block_rows // 8, 8, _LANES), axis=0)


def _softmax_ce_kernel(x_ref, t_ref, out_ref, *, n_rows, block_rows):
    """Per-row softmax cross-entropy for a (block_rows, C) tile of logits."""
    x = x_ref[...].astype(jnp.float32)                  # (block_rows, C)
    t = t_ref[...]                                      # (block_rows, 1) int32
    br, c = x.shape
    m = jnp.max(x, axis=-1, keepdims=True)
    xs = x - m
    cls = jax.lax.broadcasted_iota(jnp.int32, (br, c), 1)
    # 'picked' fused into the same pass: reuse xs (already shifted) instead of
    # re-reading x; lse - x[t] == log(sum(exp(xs))) - xs[t].
    sumexp = jnp.sum(jnp.exp(xs), axis=-1, keepdims=True)
    picked = jnp.sum(jnp.where(cls == t, xs, 0.0), axis=-1, keepdims=True)
    per_row = jnp.log(sumexp) - picked
    rows = jax.lax.broadcasted_iota(jnp.int32, (br, 1), 0)
    valid = (pl.program_id(0) * block_rows + rows) < n_rows
    out_ref[...] = jnp.where(valid, per_row, 0.0)


# ---------------------------------------------------------------------------
# Wrappers (layout plumbing only; compute lives in the kernels)
# ---------------------------------------------------------------------------

def _lane_dense_slab(a):
    """Flatten to a (rows, 128) lane-dense slab; pad tail with zeros (masked in-kernel)."""
    flat = a.reshape(-1)
    total = flat.shape[0]
    rows = max(8, pl.cdiv(total, _LANES))
    padded = rows * _LANES
    if padded != total:
        flat = jnp.pad(flat, (0, padded - total))
    return flat.reshape(rows, _LANES), total, rows


def _bce_block_rows(rows):
    return min(_MAX_BCE_BLOCK_ROWS, (rows // 8) * 8)


def bce_with_logits_mean(logits, targets):
    x, total, rows = _lane_dense_slab(logits)
    y, _, _ = _lane_dense_slab(targets)
    br = _bce_block_rows(rows)
    grid = pl.cdiv(rows, br)
    kernel = functools.partial(_bce_kernel, total=total, block_rows=br)
    partial = pl.pallas_call(
        kernel,
        out_shape=jax.ShapeDtypeStruct((grid * 8, _LANES), jnp.float32),
        grid=(grid,),
        in_specs=[pl.BlockSpec((br, _LANES), lambda i: (i, 0)),
                  pl.BlockSpec((br, _LANES), lambda i: (i, 0))],
        out_specs=pl.BlockSpec((8, _LANES), lambda i: (i, 0)),
        compiler_params=pltpu.CompilerParams(dimension_semantics=("parallel",)),
    )(x, y)
    return jnp.sum(partial) / total


def masked_bce_with_logits_mean(logits, targets):
    x, total, rows = _lane_dense_slab(logits)
    y, _, _ = _lane_dense_slab(targets)
    br = _bce_block_rows(rows)
    grid = pl.cdiv(rows, br)
    kernel = functools.partial(_masked_bce_kernel, total=total, block_rows=br)
    sums, cnts = pl.pallas_call(
        kernel,
        out_shape=(jax.ShapeDtypeStruct((grid * 8, _LANES), jnp.float32),
                   jax.ShapeDtypeStruct((grid * 8, _LANES), jnp.float32)),
        grid=(grid,),
        in_specs=[pl.BlockSpec((br, _LANES), lambda i: (i, 0)),
                  pl.BlockSpec((br, _LANES), lambda i: (i, 0))],
        out_specs=(pl.BlockSpec((8, _LANES), lambda i: (i, 0)),
                   pl.BlockSpec((8, _LANES), lambda i: (i, 0))),
        compiler_params=pltpu.CompilerParams(dimension_semantics=("parallel",)),
    )(x, y)
    return jnp.sum(sums) / jnp.sum(cnts)


def softmax_cross_entropy_mean(logits, targets):
    n, c = logits.shape
    x = logits
    t = targets.astype(jnp.int32).reshape(n, 1)
    n_arr = n
    if n < 8:                                   # tiny-batch: pad rows to one sublane group
        x = jnp.pad(x, ((0, 8 - n), (0, 0)))
        t = jnp.pad(t, ((0, 8 - n), (0, 0)), constant_values=-1)
        n_arr = 8
    itemsize = jnp.dtype(x.dtype).itemsize
    cap = max(8, ((_MAX_MC_TILE_BYTES // max(1, c * itemsize)) // 8) * 8)
    br = max(8, min(_MAX_MC_BLOCK_ROWS, cap, (n_arr // 8) * 8))
    grid = pl.cdiv(n_arr, br)
    # TODO(synk): for vocab-scale C add a class-tiled online-logsumexp grid axis;
    # here the row tile is shrunk instead so a full-C block always fits VMEM.
    kernel = functools.partial(_softmax_ce_kernel, n_rows=n, block_rows=br)
    per_row = pl.pallas_call(
        kernel,
        out_shape=jax.ShapeDtypeStruct((n_arr, 1), jnp.float32),
        grid=(grid,),
        in_specs=[pl.BlockSpec((br, c), lambda i: (i, 0)),
                  pl.BlockSpec((br, 1), lambda i: (i, 0))],
        out_specs=pl.BlockSpec((br, 1), lambda i: (i, 0)),
        compiler_params=pltpu.CompilerParams(dimension_semantics=("parallel",)),
    )(x, t)
    return jnp.sum(per_row) / n


class CELoss:
    """JAX/Pallas port of the PyTorch CELoss module (forward only)."""

    def __init__(self, num_class, multi_label):
        self.num_class = num_class
        self.multi_label = multi_label
        print(f'[INFO] Using multi_label: {self.multi_label}')

    def __call__(self, logits, targets):
        if self.num_class == 2 and (not self.multi_label):
            return bce_with_logits_mean(logits, targets)
        elif self.num_class > 2 and (not self.multi_label):
            return softmax_cross_entropy_mean(logits, targets)
        else:
            return masked_bce_with_logits_mean(logits, targets)


# ---------------------------------------------------------------------------
# Pure-JAX references (correctness checks only)
# ---------------------------------------------------------------------------

def _ref_bce(x, y):
    x = x.astype(jnp.float32); y = y.astype(jnp.float32)
    return jnp.mean(jnp.maximum(x, 0.0) - x * y + jnp.log1p(jnp.exp(-jnp.abs(x))))


def _ref_masked_bce(x, t):
    x = x.astype(jnp.float32); t = t.astype(jnp.float32)
    mask = (t == t)
    y = jnp.where(mask, t, 0.0)
    per = jnp.maximum(x, 0.0) - x * y + jnp.log1p(jnp.exp(-jnp.abs(x)))
    m = mask.astype(jnp.float32)
    return jnp.sum(jnp.where(mask, per, 0.0)) / jnp.sum(m)


def _ref_ce(x, t):
    x = x.astype(jnp.float32)
    lse = jax.scipy.special.logsumexp(x, axis=-1)
    picked = jnp.take_along_axis(x, t.astype(jnp.int32)[:, None], axis=-1)[:, 0]
    return jnp.mean(lse - picked)


# ---------------------------------------------------------------------------
# Demo
# ---------------------------------------------------------------------------

if __name__ == "__main__":
    key = jax.random.PRNGKey(0)
    k1, k2, k3, k4, k5, k6, k7, k8 = jax.random.split(key, 8)

    N, C = 8, 4

    # Branch 1: num_class == 2, not multi_label -> BCE with logits.
    logits_bin = jax.random.normal(k1, (N, C), dtype=jnp.float32)
    targets_bin = jax.random.bernoulli(k2, 0.5, (N, C)).astype(jnp.float32)
    loss_bin = CELoss(num_class=2, multi_label=False)(logits_bin, targets_bin)
    loss_bin = jax.block_until_ready(loss_bin)
    assert jnp.allclose(loss_bin, _ref_bce(logits_bin, targets_bin), atol=1e-5)

    # Branch 2: num_class > 2, not multi_label -> softmax cross-entropy.
    logits_mc = jax.random.normal(k3, (N, C), dtype=jnp.float32)
    targets_mc = jax.random.randint(k4, (N,), 0, C)
    loss_mc = CELoss(num_class=C, multi_label=False)(logits_mc, targets_mc)
    loss_mc = jax.block_until_ready(loss_mc)
    assert jnp.allclose(loss_mc, _ref_ce(logits_mc, targets_mc), atol=1e-5)

    # Branch 3: multi_label -> masked BCE (NaN targets are unlabeled).
    logits_ml = jax.random.normal(k5, (N, C), dtype=jnp.float32)
    targets_ml = targets_bin.at[0, 1].set(jnp.nan).at[3, 2].set(jnp.nan)
    loss_ml = CELoss(num_class=C, multi_label=True)(logits_ml, targets_ml)
    loss_ml = jax.block_until_ready(loss_ml)
    assert jnp.allclose(loss_ml, _ref_masked_bce(logits_ml, targets_ml), atol=1e-5)

    # Odd (non-aligned) shapes exercise the tail-masking / partial-block paths.
    N2, C2 = 37, 5
    logits_o = jax.random.normal(k6, (N2, C2), dtype=jnp.float32)
    targets_o = jax.random.bernoulli(k7, 0.5, (N2, C2)).astype(jnp.float32)
    loss_o = CELoss(num_class=2, multi_label=False)(logits_o, targets_o)
    loss_o = jax.block_until_ready(loss_o)
    assert jnp.allclose(loss_o, _ref_bce(logits_o, targets_o), atol=1e-5)

    targets_o_ml = targets_o.at[1, 3].set(jnp.nan).at[20, 0].set(jnp.nan)
    loss_o_ml = CELoss(num_class=C2, multi_label=True)(logits_o, targets_o_ml)
    loss_o_ml = jax.block_until_ready(loss_o_ml)
    assert jnp.allclose(loss_o_ml, _ref_masked_bce(logits_o, targets_o_ml), atol=1e-5)

    targets_o_mc = jax.random.randint(k8, (N2,), 0, C2)
    loss_o_mc = CELoss(num_class=C2, multi_label=False)(logits_o, targets_o_mc)
    loss_o_mc = jax.block_until_ready(loss_o_mc)
    assert jnp.allclose(loss_o_mc, _ref_ce(logits_o, targets_o_mc), atol=1e-5)

    print("KERNEL_OK")
</pallas_src>

<mosaic_0001>
module attributes {stable_mosaic.version = 11 : i64} {
  func.func @_bce_kernel(%arg0: i32, %arg1: memref<8x128xf32, #tpu.memory_space<vmem>>, %arg2: memref<8x128xf32, #tpu.memory_space<vmem>>, %arg3: memref<8x128xf32, #tpu.memory_space<vmem>>) attributes {dimension_semantics = [#tpu.dimension_semantics<parallel>], iteration_bounds = array<i64: 1>, scalar_prefetch = 0 : i64, scratch_operands = 0 : i64, tpu.core_type = #tpu.core_type<tc>, window_params = [{transform_indices = @transform_0, window_bounds = array<i64: 8, 128>}, {transform_indices = @transform_1, window_bounds = array<i64: 8, 128>}, {transform_indices = @transform_2, window_bounds = array<i64: 8, 128>}]} {
    %c0 = arith.constant 0 : index
    %c0_0 = arith.constant 0 : index
    %0 = vector.load %arg1[%c0, %c0_0] : memref<8x128xf32, #tpu.memory_space<vmem>>, vector<8x128xf32>
    %c0_1 = arith.constant 0 : index
    %c0_2 = arith.constant 0 : index
    %1 = vector.load %arg2[%c0_1, %c0_2] : memref<8x128xf32, #tpu.memory_space<vmem>>, vector<8x128xf32>
    %cst = arith.constant 0.000000e+00 : f32
    %2 = vector.broadcast %cst : f32 to vector<8x128xf32>
    %3 = arith.maximumf %0, %2 : vector<8x128xf32>
    %4 = arith.mulf %0, %1 : vector<8x128xf32>
    %5 = arith.subf %3, %4 : vector<8x128xf32>
    %6 = math.absf %0 : vector<8x128xf32>
    %cst_3 = arith.constant 0.000000e+00 : f32
    %7 = vector.broadcast %cst_3 : f32 to vector<8x128xf32>
    %8 = arith.subf %7, %6 : vector<8x128xf32>
    %9 = math.exp %8 : vector<8x128xf32>
    %10 = math.log1p %9 : vector<8x128xf32>
    %11 = arith.addf %5, %10 : vector<8x128xf32>
    %12 = tpu.iota {dimensions = array<i32: 0>} : vector<8x128xi32>
    %13 = tpu.iota {dimensions = array<i32: 1>} : vector<8x128xi32>
    %c8_i32 = arith.constant 8 : i32
    %14 = arith.muli %arg0, %c8_i32 : i32
    %15 = vector.broadcast %14 : i32 to vector<8x128xi32>
    %16 = arith.addi %15, %12 : vector<8x128xi32>
    %c128_i32 = arith.constant 128 : i32
    %17 = vector.broadcast %c128_i32 : i32 to vector<8x128xi32>
    %18 = arith.muli %16, %17 : vector<8x128xi32>
    %19 = arith.addi %18, %13 : vector<8x128xi32>
    %c32_i32 = arith.constant 32 : i32
    %20 = vector.broadcast %c32_i32 : i32 to vector<8x128xi32>
    %21 = arith.cmpi slt, %19, %20 : vector<8x128xi32>
    %cst_4 = arith.constant 0.000000e+00 : f32
    %22 = vector.broadcast %cst_4 : f32 to vector<8x128xf32>
    %23 = arith.select %21, %11, %22 : vector<8x128xi1>, vector<8x128xf32>
    %24 = vector.shape_cast %23 : vector<8x128xf32> to vector<1x8x128xf32>
    %cst_5 = arith.constant dense<0.000000e+00> : vector<8x128xf32>
    %25 = vector.multi_reduction <add>, %24, %cst_5 [0] : vector<1x8x128xf32> to vector<8x128xf32>
    %c0_6 = arith.constant 0 : index
    %c0_7 = arith.constant 0 : index
    %26 = vector.load %arg3[%c0_6, %c0_7] : memref<8x128xf32, #tpu.memory_space<vmem>>, vector<8x128xf32>
    tpu.vector_store %arg3[%c0_6, %c0_7], %25 {strides = array<i32>} : memref<8x128xf32, #tpu.memory_space<vmem>>, vector<8x128xf32>,
    return
  }
  func.func @transform_0(%arg0: i32) -> (i32, i32) {
    %c0_i32 = arith.constant 0 : i32
    %c0_i32_0 = arith.constant 0 : i32
    return %arg0, %c0_i32 : i32, i32
  }
  func.func @transform_1(%arg0: i32) -> (i32, i32) {
    %c0_i32 = arith.constant 0 : i32
    %c0_i32_0 = arith.constant 0 : i32
    return %arg0, %c0_i32 : i32, i32
  }
  func.func @transform_2(%arg0: i32) -> (i32, i32) {
    %c0_i32 = arith.constant 0 : i32
    %c0_i32_0 = arith.constant 0 : i32
    return %arg0, %c0_i32 : i32, i32
  }
}

</mosaic_0001>

<llo_original>
// kernel: tpu_custom_call.1
$region0: #{tpu_custom_call.1}
  #allocation0 [shape = 'u32[]', space=smem, size = 0x4, offset = 0x4, fixed_abs, tag = 'smem constant byte address 0x4 - core index']
  #allocation1 [shape = 'u32[144,128]{1,0:T(1,128)}', space=vmem, size = 0x12000, scoped, tag = 'internal scratch']
  %s0 = inlined_call_operand.hbm [shape: f32[8,128], index: 0, kind: input, shape index: {}]
  %s1 = inlined_call_operand.hbm [shape: f32[8,128], index: 1, kind: input, shape index: {}]
  %s2 = inlined_call_operand.hbm [shape: f32[8,128], index: 2, kind: output, shape index: {}]
  %s3 = sld [smem:[#allocation0]]
  $region26: #{tpu_custom_call.1} parent=0
    _
  %s5 = ssub.s32 1, %s3
  %s6 = scalar_select 0, %s5, %s3
  $region1: #{tpu_custom_call.1} parent=0
    #allocation2 [shape = 'u8[4096]{0}', space=vmem, size = 0x1000, scoped, tag = 'input window, operand 0, single buffered']
    #allocation3 [shape = 's32[1]{0}', space=sflag, size = 0x4, scoped, tag = 'scoped memory for tpu_custom_call.1']
    #allocation4 [shape = 's32[1]{0}', space=sflag, size = 0x4, scoped, tag = 'scoped memory for tpu_custom_call.1']
    #allocation5 [shape = 'u8[4096]{0}', space=vmem, size = 0x1000, scoped, tag = 'input window, operand 1, single buffered']
    #allocation6 [shape = 's32[1]{0}', space=sflag, size = 0x4, scoped, tag = 'scoped memory for tpu_custom_call.1']
    #allocation7 [shape = 'u8[4096]{0}', space=vmem, size = 0x1000, scoped, tag = 'output window, operand 0, single buffered']
    %7 = vsyncpa [#allocation3], 0
    %8 = vsyncpa [#allocation6], 0
    %9 = vsyncpa [#allocation4], 0
    // Predicated region
    $region2: #{tpu_custom_call.1} parent=1 // pred_check
      _
    $region3: #{tpu_custom_call.1} parent=1 // pred_check_branch
      %11 = sbr.rel (0) target = $region5
    $region4: #{tpu_custom_call.1} parent=1 // pred_region
      %s13 = ssub.s32 128, 128
      %14 = vsyncadd [#allocation3], %s13
      %s16 = sshll.u32 [#allocation2], 4
      %s17 = int_to_ptr.vmem [resolvable:$true] %s16
      %19 = dma.hbm_to_vmem [thread:$0]  %s0, 128, %s17, [#allocation3]
    $region5: #{tpu_custom_call.1} parent=1 // pred_fallthru
      _
    // Predicated region
    $region6: #{tpu_custom_call.1} parent=1 // pred_check
      _
    $region7: #{tpu_custom_call.1} parent=1 // pred_check_branch
      %21 = sbr.rel (0) target = $region9
    $region8: #{tpu_custom_call.1} parent=1 // pred_region
      %s23 = ssub.s32 128, 128
      %24 = vsyncadd [#allocation6], %s23
      %s26 = sshll.u32 [#allocation5], 4
      %s27 = int_to_ptr.vmem [resolvable:$true] %s26
      %29 = dma.hbm_to_vmem [thread:$0]  %s1, 128, %s27, [#allocation6]
    $region9: #{tpu_custom_call.1} parent=1 // pred_fallthru
      _
    // Predicated region
    $region10: #{tpu_custom_call.1} parent=1 // pred_check
      _
    $region11: #{tpu_custom_call.1} parent=1 // pred_check_branch
      %31 = sbr.rel (0) target = $region13
    $region12: #{tpu_custom_call.1} parent=1 // pred_region
      %32 = dma.done [#allocation3], 128
    $region13: #{tpu_custom_call.1} parent=1 // pred_fallthru
      _
    // Predicated region
    $region14: #{tpu_custom_call.1} parent=1 // pred_check
      _
    $region15: #{tpu_custom_call.1} parent=1 // pred_check_branch
      %34 = sbr.rel (0) target = $region17
    $region16: #{tpu_custom_call.1} parent=1 // pred_region
      %35 = dma.done [#allocation6], 128
    $region17: #{tpu_custom_call.1} parent=1 // pred_fallthru
      _
    %v36 = vld [vmem:[#allocation2] sm:$0xff]
    %v37 = vld [vmem:[#allocation5] sm:$0xff]
    %v38 = vmax.f32 %v36, 0.0
    %v39 = vmul.f32 %v36, %v37
    %v40 = vsub.f32 %v38, %v39
    %v41 = vand.u32 2147483647, %v36
    %v42 = vsub.f32 0.0, %v41
    %v43 = vmul.f32 %v42, 1.442695
    %v44 = vpow.pop %v43
    %v45 = vadd.f32 %v44, 1.0
    %v46 = vlog2.pop %v45
    %v47 = vmul.f32 %v46, 0.6931472
    %v48 = vmul.f32 -0.5, %v44
    %v49 = vadd.f32 %v48, 1.0
    %v50 = vmul.f32 %v49, %v44
    %v51 = vand.u32 2147483647, %v44
    %vm52 = vcmp.lt.f32.partialorder %v51, 0.0004427343
    %v53 = vsel %vm52, %v50, %v47
    %v54 = vadd.f32 %v40, %v53
    %v55 = vlaneseq
    %v56 = vshrl.u32 %v55, 7
    %v57 = vlaneseq
    %v58 = vand.u32 %v57, 127
    %s59 = smul.u32 0, 8
    %v60 = vstv %s59
    %v61 = vadd.s32 %v60, %v56
    %v62 = vmul.u32 %v61, 128
    %v63 = vadd.s32 %v62, %v58
    %vm64 = vcmp.lt.s32.totalorder %v63, 32
    %v65 = vsel %vm64, %v54, 0.0
    %v66 = vadd.f32 %v65, 0.0
    %67 = vst [vmem:[#allocation7] sm:$0xff] %v66
    // Predicated region
    $region18: #{tpu_custom_call.1} parent=1 // pred_check
      _
    $region19: #{tpu_custom_call.1} parent=1 // pred_check_branch
      %69 = sbr.rel (0) target = $region21
    $region20: #{tpu_custom_call.1} parent=1 // pred_region
      %s71 = ssub.s32 128, 128
      %72 = vsyncadd [#allocation4], %s71
      %s74 = sshll.u32 [#allocation7], 4
      %s75 = int_to_ptr.vmem [resolvable:$true] %s74
      %77 = dma.vmem_to_hbm [thread:$0]  %s75, 128, %s2, [#allocation4]
    $region21: #{tpu_custom_call.1} parent=1 // pred_fallthru
      _
    // Predicated region
    $region22: #{tpu_custom_call.1} parent=1 // pred_check
      _
    $region23: #{tpu_custom_call.1} parent=1 // pred_check_branch
      %79 = sbr.rel (0) target = $region25
    $region24: #{tpu_custom_call.1} parent=1 // pred_region
      %80 = dma.done [#allocation4], 128
    $region25: #{tpu_custom_call.1} parent=1 // pred_fallthru
      _
    %81 = vsyncpa [#allocation3], 1
    %82 = vsyncpa [#allocation6], 1
    %83 = vsyncpa [#allocation4], 1

</llo_original>
